<compile_context>
chip_gen: v5e
topology: v5e:2x2
jax: 0.10.0
libtpu: 0.0.40
codegen_flags: <defaults>
</compile_context>

<pallas_src>
import functools

import jax
import jax.numpy as jnp
import numpy as np
from jax.experimental import pallas as pl
from jax.experimental.pallas import tpu as pltpu


def _round_up(x: int, m: int) -> int:
    return ((x + m - 1) // m) * m


def _choose_tb(batch: int, target_tb: int = 256) -> int:
    """Pick a batch tile: large enough to amortize the ~0.35us per-grid-step
    overhead and feed the MXU M dimension, but keep >= 2 grid steps when the
    batch allows it so the 'parallel' axis shards across v7x's 2 TensorCores."""
    if batch <= 8:
        return 8
    if batch <= 2 * target_tb:
        return _round_up(-(-batch // 2), 8)   # ceil(B/2), sublane-aligned
    return target_tb


def _duq_kernel(x_ref, w_ref, cent_ref, red_ref, out_ref, *,
                inv_two_sigma_sq, num_classes):
    C = num_classes
    x = x_ref[...]                                              # (tb, F)
    # einsum('clf,bf->bcl') flattened to a single MXU matmul -> (tb, C*L)
    z = jnp.dot(x, w_ref[...], preferred_element_type=jnp.float32)
    sq = jnp.square(z - cent_ref[...])                          # (tb, C*L)
    # per-class mean over L, duplicated into lane groups [0:C] and [C:2C]
    msq = jnp.dot(sq, red_ref[...], preferred_element_type=jnp.float32)  # (tb, 128)

    log_rbf = -msq * inv_two_sigma_sq   # cols [0:C] & [C:2C] hold log(rbf); rest 0
    rbf = jnp.exp(log_rbf)              # EUP

    col = jax.lax.broadcasted_iota(jnp.int32, log_rbf.shape, 1)
    is_rbf = col < C
    is_logit = jnp.logical_and(col >= C, col < 2 * C)
    is_duq = col == 2 * C

    rbf_masked = jnp.where(is_rbf, rbf, 0.0)
    s = jnp.sum(rbf_masked, axis=1, keepdims=True)              # XLU lane-reduce
    # logit = log(rbf / s) = log_rbf - log(s), clamped like torch .clamp(min=...)
    logit = jnp.maximum(log_rbf - jnp.log(s), jnp.finfo(jnp.float32).min)
    duq = 1.0 - jnp.max(rbf_masked, axis=1, keepdims=True)      # XLU lane-reduce

    # single lane-dense (tb, 128) store: [ rbf | logit | duq | 0-padding ]
    out_ref[...] = jnp.where(is_rbf, rbf,
                   jnp.where(is_logit, logit,
                   jnp.where(is_duq, duq, 0.0)))


def prepare_duq_params(weight, ema_embedding_sums, ema_num_samples):
    """One-time, parameter-only prep.  Keep this OUT of the per-step path."""
    C, L, F = weight.shape
    out_w = _round_up(2 * C + 1, 128)
    # W2[f, c*L + l] = W[c, l, f]
    w2 = jnp.transpose(weight, (2, 0, 1)).reshape(F, C * L).astype(jnp.float32)
    centroids = (ema_embedding_sums / ema_num_samples[:, None]).reshape(1, C * L)
    # block-diagonal (1/L) reduction matrix, duplicated into cols [0:C] and [C:2C]
    blk = jnp.repeat(jnp.eye(C, dtype=jnp.float32), L, axis=0) / L   # (C*L, C)
    red = jnp.zeros((C * L, out_w), jnp.float32)
    red = red.at[:, :C].set(blk).at[:, C:2 * C].set(blk)
    return {
        "w2": w2,
        "centroids": centroids.astype(jnp.float32),
        "red": red,
        "num_classes": C,
    }


def duq_head_forward(features, params, rbf_length_scale, *, tb=None):
    """Eval-mode forward of DUQHead: returns rbf, logit and duq_value."""
    w2, cent, red = params["w2"], params["centroids"], params["red"]
    C = params["num_classes"]
    B, F = features.shape
    F2, CL = w2.shape
    out_w = red.shape[1]
    assert F == F2 and cent.shape == (1, CL) and red.shape == (CL, out_w)

    if tb is None:
        tb = _choose_tb(B)
    assert tb % 8 == 0, "batch tile must be a multiple of the 8-row sublane"

    b_pad = _round_up(B, tb)
    x = features.astype(jnp.float32)
    if b_pad != B:
        x = jnp.pad(x, ((0, b_pad - B), (0, 0)))

    inv_two_sigma_sq = 1.0 / (2.0 * float(rbf_length_scale) ** 2)
    kernel = functools.partial(
        _duq_kernel, inv_two_sigma_sq=inv_two_sigma_sq, num_classes=C)

    # NOTE: the grid-invariant parameter blocks (w2, centroids, red) are tiny
    # here; before scaling F / C*L budget them against v7x's 64 MiB VMEM
    # (single-buffer them / add a K-axis reduction grid when they grow).
    packed = pl.pallas_call(
        kernel,
        out_shape=jax.ShapeDtypeStruct((b_pad, out_w), jnp.float32),
        grid_spec=pltpu.PrefetchScalarGridSpec(
            num_scalar_prefetch=0,
            grid=(b_pad // tb,),
            in_specs=[
                pl.BlockSpec((tb, F), lambda i: (i, 0)),
                pl.BlockSpec((F, CL), lambda i: (0, 0)),
                pl.BlockSpec((1, CL), lambda i: (0, 0)),
                pl.BlockSpec((CL, out_w), lambda i: (0, 0)),
            ],
            out_specs=pl.BlockSpec((tb, out_w), lambda i: (i, 0)),
        ),
        compiler_params=pltpu.CompilerParams(
            dimension_semantics=("parallel",)),
    )(x, w2, cent, red)

    rbf = packed[:B, :C]
    logit = packed[:B, C:2 * C]
    duq = packed[:B, 2 * C]
    return {"rbf": rbf, "logit": logit, "duq_value": duq}


def duq_head_reference(features, weight, ema_embedding_sums, ema_num_samples,
                       rbf_length_scale):
    """Pure-JAX reference mirroring the PyTorch module (eval mode)."""
    latent = jnp.einsum("clf,bf->bcl", weight, features)
    centroids = ema_embedding_sums / ema_num_samples[:, None]
    diffs = latent - centroids[None]
    rbf = jnp.exp(-jnp.mean(diffs ** 2, axis=-1) / (2.0 * rbf_length_scale ** 2))
    min_real = jnp.finfo(rbf.dtype).min
    logit = jnp.maximum(jnp.log(rbf / jnp.sum(rbf, axis=1, keepdims=True)), min_real)
    duq = 1.0 - jnp.max(rbf, axis=1)
    return {"rbf": rbf, "logit": logit, "duq_value": duq}


if __name__ == "__main__":
    # Deterministic synthetic parameters (DUQHead.__init__ shapes).
    num_classes = 4
    num_features = 32
    num_hidden_features = 16
    rbf_length_scale = 0.5
    batch = 16

    key = jax.random.PRNGKey(0)
    k_x, k_w, k_emb = jax.random.split(key, 3)

    features = jax.random.normal(k_x, (batch, num_features), dtype=jnp.float32)

    # kaiming_normal_(nonlinearity='relu'): std = sqrt(2 / fan_in), fan_in = L * F
    std = float(np.sqrt(2.0 / (num_hidden_features * num_features)))
    weight = std * jax.random.normal(
        k_w, (num_classes, num_hidden_features, num_features), dtype=jnp.float32)

    ema_num_samples = jnp.full((num_classes,), 128.0 / num_classes, dtype=jnp.float32)
    ema_embedding_sums = jax.random.normal(
        k_emb, (num_classes, num_hidden_features), dtype=jnp.float32)

    # One-time parameter prep (hoisted out of the per-call path).
    params = prepare_duq_params(weight, ema_embedding_sums, ema_num_samples)
    params = jax.block_until_ready(params)

    out = duq_head_forward(features, params, rbf_length_scale)
    out = jax.block_until_ready(out)

    ref = duq_head_reference(features, weight, ema_embedding_sums,
                             ema_num_samples, rbf_length_scale)

    np.testing.assert_allclose(np.asarray(out["rbf"]), np.asarray(ref["rbf"]),
                               rtol=1e-4, atol=1e-5)
    np.testing.assert_allclose(np.asarray(out["logit"]), np.asarray(ref["logit"]),
                               rtol=1e-4, atol=1e-5)
    np.testing.assert_allclose(np.asarray(out["duq_value"]),
                               np.asarray(ref["duq_value"]),
                               rtol=1e-4, atol=1e-5)

    # Ragged-batch path (padding + slicing) sanity check.
    out13 = jax.block_until_ready(
        duq_head_forward(features[:13], params, rbf_length_scale))
    ref13 = duq_head_reference(features[:13], weight, ema_embedding_sums,
                               ema_num_samples, rbf_length_scale)
    np.testing.assert_allclose(np.asarray(out13["logit"]),
                               np.asarray(ref13["logit"]),
                               rtol=1e-4, atol=1e-5)
    np.testing.assert_allclose(np.asarray(out13["duq_value"]),
                               np.asarray(ref13["duq_value"]),
                               rtol=1e-4, atol=1e-5)

    print("KERNEL_OK")
</pallas_src>

<mosaic_0001>
module attributes {stable_mosaic.version = 11 : i64} {
  func.func @_duq_kernel(%arg0: i32, %arg1: memref<8x32xf32, #tpu.memory_space<vmem>>, %arg2: memref<32x64xf32, #tpu.memory_space<vmem>>, %arg3: memref<1x64xf32, #tpu.memory_space<vmem>>, %arg4: memref<64x128xf32, #tpu.memory_space<vmem>>, %arg5: memref<8x128xf32, #tpu.memory_space<vmem>>) attributes {dimension_semantics = [#tpu.dimension_semantics<parallel>], iteration_bounds = array<i64: 2>, scalar_prefetch = 0 : i64, scratch_operands = 0 : i64, tpu.core_type = #tpu.core_type<tc>, window_params = [{transform_indices = @transform_0, window_bounds = array<i64: 8, 32>}, {pipeline_mode = #tpu.pipeline_mode<synchronous>, transform_indices = @transform_1, window_bounds = array<i64: 32, 64>}, {pipeline_mode = #tpu.pipeline_mode<synchronous>, transform_indices = @transform_2, window_bounds = array<i64: 1, 64>}, {pipeline_mode = #tpu.pipeline_mode<synchronous>, transform_indices = @transform_3, window_bounds = array<i64: 64, 128>}, {transform_indices = @transform_4, window_bounds = array<i64: 8, 128>}]} {
    %c0 = arith.constant 0 : index
    %c0_0 = arith.constant 0 : index
    %0 = vector.load %arg1[%c0, %c0_0] : memref<8x32xf32, #tpu.memory_space<vmem>>, vector<8x32xf32>
    %c0_1 = arith.constant 0 : index
    %c0_2 = arith.constant 0 : index
    %1 = vector.load %arg2[%c0_1, %c0_2] : memref<32x64xf32, #tpu.memory_space<vmem>>, vector<32x64xf32>
    %cst = arith.constant dense<0.000000e+00> : vector<8x64xf32>
    %2 = tpu.matmul %0, %1, %cst {dimension_numbers = #tpu.dot_dimension_numbers<[1], [0], [0], [1], [0, 0, 1, 1], [], []>} : vector<8x32xf32>, vector<32x64xf32>, vector<8x64xf32> -> vector<8x64xf32>
    %c0_3 = arith.constant 0 : index
    %c0_4 = arith.constant 0 : index
    %3 = vector.load %arg3[%c0_3, %c0_4] : memref<1x64xf32, #tpu.memory_space<vmem>>, vector<1x64xf32>
    %4 = vector.broadcast %3 : vector<1x64xf32> to vector<8x64xf32>
    %5 = arith.subf %2, %4 : vector<8x64xf32>
    %6 = arith.mulf %5, %5 : vector<8x64xf32>
    %c0_5 = arith.constant 0 : index
    %c0_6 = arith.constant 0 : index
    %7 = vector.load %arg4[%c0_5, %c0_6] : memref<64x128xf32, #tpu.memory_space<vmem>>, vector<64x128xf32>
    %cst_7 = arith.constant dense<0.000000e+00> : vector<8x128xf32>
    %8 = tpu.matmul %6, %7, %cst_7 {dimension_numbers = #tpu.dot_dimension_numbers<[1], [0], [0], [1], [0, 0, 1, 1], [], []>} : vector<8x64xf32>, vector<64x128xf32>, vector<8x128xf32> -> vector<8x128xf32>
    %cst_8 = arith.constant 0.000000e+00 : f32
    %9 = vector.broadcast %cst_8 : f32 to vector<8x128xf32>
    %10 = arith.subf %9, %8 : vector<8x128xf32>
    %cst_9 = arith.constant 2.000000e+00 : f32
    %11 = vector.broadcast %cst_9 : f32 to vector<8x128xf32>
    %12 = arith.mulf %10, %11 : vector<8x128xf32>
    %13 = math.exp %12 : vector<8x128xf32>
    %14 = tpu.iota {dimensions = array<i32: 1>} : vector<8x128xi32>
    %c4_i32 = arith.constant 4 : i32
    %15 = vector.broadcast %c4_i32 : i32 to vector<8x128xi32>
    %16 = arith.cmpi slt, %14, %15 : vector<8x128xi32>
    %c4_i32_10 = arith.constant 4 : i32
    %17 = vector.broadcast %c4_i32_10 : i32 to vector<8x128xi32>
    %18 = arith.cmpi sge, %14, %17 : vector<8x128xi32>
    %c8_i32 = arith.constant 8 : i32
    %19 = vector.broadcast %c8_i32 : i32 to vector<8x128xi32>
    %20 = arith.cmpi slt, %14, %19 : vector<8x128xi32>
    %21 = arith.andi %18, %20 : vector<8x128xi1>
    %c8_i32_11 = arith.constant 8 : i32
    %22 = vector.broadcast %c8_i32_11 : i32 to vector<8x128xi32>
    %23 = arith.cmpi eq, %14, %22 : vector<8x128xi32>
    %cst_12 = arith.constant 0.000000e+00 : f32
    %24 = vector.broadcast %cst_12 : f32 to vector<8x128xf32>
    %25 = arith.select %16, %13, %24 : vector<8x128xi1>, vector<8x128xf32>
    %cst_13 = arith.constant dense<0.000000e+00> : vector<8xf32>
    %26 = vector.multi_reduction <add>, %25, %cst_13 [1] : vector<8x128xf32> to vector<8xf32>
    %27 = vector.shape_cast %26 : vector<8xf32> to vector<8x1xf32>
    %28 = math.log %27 : vector<8x1xf32>
    %29 = vector.broadcast %28 : vector<8x1xf32> to vector<8x128xf32>
    %30 = arith.subf %12, %29 : vector<8x128xf32>
    %cst_14 = arith.constant -3.40282347E+38 : f32
    %31 = vector.broadcast %cst_14 : f32 to vector<8x128xf32>
    %32 = arith.maximumf %30, %31 : vector<8x128xf32>
    %cst_15 = arith.constant dense<0xFF800000> : vector<8xf32>
    %33 = vector.multi_reduction <maximumf>, %25, %cst_15 [1] : vector<8x128xf32> to vector<8xf32>
    %34 = vector.shape_cast %33 : vector<8xf32> to vector<8x1xf32>
    %cst_16 = arith.constant 1.000000e+00 : f32
    %35 = vector.broadcast %cst_16 : f32 to vector<8x1xf32>
    %36 = arith.subf %35, %34 : vector<8x1xf32>
    %cst_17 = arith.constant 0.000000e+00 : f32
    %37 = vector.shape_cast %36 : vector<8x1xf32> to vector<8x1xf32>
    %38 = vector.broadcast %37 : vector<8x1xf32> to vector<8x128xf32>
    %39 = vector.broadcast %cst_17 : f32 to vector<8x128xf32>
    %40 = arith.select %23, %38, %39 : vector<8x128xi1>, vector<8x128xf32>
    %41 = arith.select %21, %32, %40 : vector<8x128xi1>, vector<8x128xf32>
    %42 = arith.select %16, %13, %41 : vector<8x128xi1>, vector<8x128xf32>
    %c0_18 = arith.constant 0 : index
    %c0_19 = arith.constant 0 : index
    %43 = vector.load %arg5[%c0_18, %c0_19] : memref<8x128xf32, #tpu.memory_space<vmem>>, vector<8x128xf32>
    tpu.vector_store %arg5[%c0_18, %c0_19], %42 {strides = array<i32>} : memref<8x128xf32, #tpu.memory_space<vmem>>, vector<8x128xf32>,
    return
  }
  func.func @transform_0(%arg0: i32) -> (i32, i32) {
    %c0_i32 = arith.constant 0 : i32
    %c0_i32_0 = arith.constant 0 : i32
    return %arg0, %c0_i32 : i32, i32
  }
  func.func @transform_1(%arg0: i32) -> (i32, i32) {
    %c0_i32 = arith.constant 0 : i32
    %c0_i32_0 = arith.constant 0 : i32
    %c0_i32_1 = arith.constant 0 : i32
    return %c0_i32, %c0_i32_0 : i32, i32
  }
  func.func @transform_2(%arg0: i32) -> (i32, i32) {
    %c0_i32 = arith.constant 0 : i32
    %c0_i32_0 = arith.constant 0 : i32
    %c0_i32_1 = arith.constant 0 : i32
    return %c0_i32, %c0_i32_0 : i32, i32
  }
  func.func @transform_3(%arg0: i32) -> (i32, i32) {
    %c0_i32 = arith.constant 0 : i32
    %c0_i32_0 = arith.constant 0 : i32
    %c0_i32_1 = arith.constant 0 : i32
    return %c0_i32, %c0_i32_0 : i32, i32
  }
  func.func @transform_4(%arg0: i32) -> (i32, i32) {
    %c0_i32 = arith.constant 0 : i32
    %c0_i32_0 = arith.constant 0 : i32
    return %arg0, %c0_i32 : i32, i32
  }
}

</mosaic_0001>

<llo_original>
// kernel: tpu_custom_call.1
$region0: #{tpu_custom_call.1}
  #allocation0 [shape = 'u32[]', space=smem, size = 0x4, offset = 0x4, fixed_abs, tag = 'smem constant byte address 0x4 - core index']
  #allocation1 [shape = 'u32[72,128]{1,0:T(1,128)}', space=vmem, size = 0x9000, scoped, tag = 'internal scratch']
  %s0 = inlined_call_operand.hbm [shape: f32[16,32], index: 0, kind: input, shape index: {}]
  %s1 = inlined_call_operand.hbm [shape: f32[32,64], index: 1, kind: input, shape index: {}]
  %s2 = inlined_call_operand.vmem [shape: f32[1,64], index: 2, kind: input, shape index: {}]
  %s3 = inlined_call_operand.hbm [shape: f32[64,128], index: 3, kind: input, shape index: {}]
  %s4 = inlined_call_operand.hbm [shape: f32[16,128], index: 4, kind: output, shape index: {}]
  %s5 = sld [smem:[#allocation0]]
  $region61: #{tpu_custom_call.1} parent=0
    _
  %s7 = ssub.s32 1, %s5
  %s8 = scalar_select 0, %s7, %s5
  $region1: #{tpu_custom_call.1} parent=0
    #allocation2 [shape = 'u8[8192]{0}', space=vmem, size = 0x2000, scoped, tag = 'input window, operand 0']
    #allocation3 [shape = 's32[2]{0}', space=sflag, size = 0x8, scoped, tag = 'scoped memory for tpu_custom_call.1']
    #allocation4 [shape = 's32[2]{0}', space=sflag, size = 0x8, scoped, tag = 'scoped memory for tpu_custom_call.1']
    #allocation5 [shape = 'u8[16384]{0}', space=vmem, size = 0x4000, scoped, tag = 'input window, operand 1, single buffered']
    #allocation6 [shape = 's32[1]{0}', space=sflag, size = 0x4, scoped, tag = 'scoped memory for tpu_custom_call.1']
    #allocation7 [shape = 'u8[32768]{0}', space=vmem, size = 0x8000, scoped, tag = 'input window, operand 3, single buffered']
    #allocation8 [shape = 'u8[8192]{0}', space=vmem, size = 0x2000, scoped, tag = 'output window, operand 0']
    %9 = vsyncpa [#allocation3], 0
    %s10 = scalar_lea.sflag [#allocation3], 1
    %11 = vsyncpa %s10, 0
    %12 = vsyncpa [#allocation6], 0
    %13 = vsyncpa [#allocation4], 0
    %s14 = scalar_lea.sflag [#allocation4], 1
    %15 = vsyncpa %s14, 0
    loop: start=0, step=1, limit=4
    $region2: #{tpu_custom_call.1} parent=1 // loop_pre_header
      _
    $region3: #{tpu_custom_call.1} parent=1 // loop_header
      %s17 = sphi 0, %s21
      %p18 = scmp.ge.s32.totalorder %s17, 4
      %s27 = sphi 0, %s29
      %s30 = sphi 0, %s27
      %s31 = sphi 0, %s30
      %s47 = sphi 0, %s31
      %s51 = sphi 0, %s51
      %s53 = sphi 0, %s51
      %s54 = sphi 0, %s53
      %s68 = sphi 0, %s54
      %s72 = sphi 0, %s72
      %s74 = sphi 0, %s72
      %s75 = sphi 0, %s74
      %s89 = sphi 0, %s75
      %s93 = sphi 0, %s93
      %s95 = sphi 0, %s93
      %s96 = sphi 0, %s95
      %s110 = sphi 0, %s96
      %s116 = sphi 0, %s118
      %s119 = sphi 0, %s116
      %s120 = sphi 0, %s119
      %s136 = sphi 0, %s120
    $region4: #{tpu_custom_call.1} parent=1 // loop_header_branch
      %20 = sbr.rel (%p18) target = $region8
    $region5: #{tpu_custom_call.1} parent=1 // loop_body
      %s22 = ssub.s32 %s17, 1
      %s23 = ssub.s32 %s17, 2
      %s24 = sadd.s32 %s17, 1
      %s25 = ssub.s32 %s17, %s24
      %p26 = scmp.eq.s32.totalorder %s25, 0
      %s28 = sadd.s32 %s27, 1
      %s29 = scalar_select %p26, %s27, %s28
      %p32 = pneg %p26
      %p33 = scmp.eq.s32.totalorder %s17, 1
      %p34 = por %p32, %p33
      %p35 = scmp.ne.s32.totalorder %s27, %s30
      %p36 = scmp.eq.s32.totalorder %s17, 0
      %p37 = por %p35, %p36
      %p38 = scmp.ne.s32.totalorder %s27, %s30
      %p39 = scmp.eq.s32.totalorder %s22, 1
      %p40 = por %p38, %p39
      %p41 = scmp.ne.s32.totalorder %s30, %s31
      %p42 = scmp.eq.s32.totalorder %s22, 0
      %p43 = por %p41, %p42
      %p44 = scmp.ne.s32.totalorder %s30, %s31
      %p45 = scmp.eq.s32.totalorder %s23, 1
      %p46 = por %p44, %p45
      %p48 = scmp.ne.s32.totalorder %s31, %s47
      %p49 = scmp.eq.s32.totalorder %s23, 0
      %p50 = por %p48, %p49
      %s52 = sadd.s32 %s51, 1
      %p55 = scmp.eq.s32.totalorder %s17, 1
      %p56 = scmp.ne.s32.totalorder %s51, %s53
      %p57 = scmp.eq.s32.totalorder %s17, 0
      %p58 = por %p56, %p57
      %p59 = scmp.ne.s32.totalorder %s51, %s53
      %p60 = scmp.eq.s32.totalorder %s22, 1
      %p61 = por %p59, %p60
      %p62 = scmp.ne.s32.totalorder %s53, %s54
      %p63 = scmp.eq.s32.totalorder %s22, 0
      %p64 = por %p62, %p63
      %p65 = scmp.ne.s32.totalorder %s53, %s54
      %p66 = scmp.eq.s32.totalorder %s23, 1
      %p67 = por %p65, %p66
      %p69 = scmp.ne.s32.totalorder %s54, %s68
      %p70 = scmp.eq.s32.totalorder %s23, 0
      %p71 = por %p69, %p70
      %s73 = sadd.s32 %s72, 1
      %p76 = scmp.eq.s32.totalorder %s17, 1
      %p77 = scmp.ne.s32.totalorder %s72, %s74
      %p78 = scmp.eq.s32.totalorder %s17, 0
      %p79 = por %p77, %p78
      %p80 = scmp.ne.s32.totalorder %s72, %s74
      %p81 = scmp.eq.s32.totalorder %s22, 1
      %p82 = por %p80, %p81
      %p83 = scmp.ne.s32.totalorder %s74, %s75
      %p84 = scmp.eq.s32.totalorder %s22, 0
      %p85 = por %p83, %p84
      %p86 = scmp.ne.s32.totalorder %s74, %s75
      %p87 = scmp.eq.s32.totalorder %s23, 1
      %p88 = por %p86, %p87
      %p90 = scmp.ne.s32.totalorder %s75, %s89
      %p91 = scmp.eq.s32.totalorder %s23, 0
      %p92 = por %p90, %p91
      %s94 = sadd.s32 %s93, 1
      %p97 = scmp.eq.s32.totalorder %s17, 1
      %p98 = scmp.ne.s32.totalorder %s93, %s95
      %p99 = scmp.eq.s32.totalorder %s17, 0
      %p100 = por %p98, %p99
      %p101 = scmp.ne.s32.totalorder %s93, %s95
      %p102 = scmp.eq.s32.totalorder %s22, 1
      %p103 = por %p101, %p102
      %p104 = scmp.ne.s32.totalorder %s95, %s96
      %p105 = scmp.eq.s32.totalorder %s22, 0
      %p106 = por %p104, %p105
      %p107 = scmp.ne.s32.totalorder %s95, %s96
      %p108 = scmp.eq.s32.totalorder %s23, 1
      %p109 = por %p107, %p108
      %p111 = scmp.ne.s32.totalorder %s96, %s110
      %p112 = scmp.eq.s32.totalorder %s23, 0
      %p113 = por %p111, %p112
      %s114 = ssub.s32 %s17, %s24
      %p115 = scmp.eq.s32.totalorder %s114, 0
      %s117 = sadd.s32 %s116, 1
      %s118 = scalar_select %p115, %s116, %s117
      %p121 = pneg %p115
      %p122 = scmp.eq.s32.totalorder %s17, 1
      %p123 = por %p121, %p122
      %p124 = scmp.ne.s32.totalorder %s116, %s119
      %p125 = scmp.eq.s32.totalorder %s17, 0
      %p126 = por %p124, %p125
      %p127 = scmp.ne.s32.totalorder %s116, %s119
      %p128 = scmp.eq.s32.totalorder %s22, 1
      %p129 = por %p127, %p128
      %p130 = scmp.ne.s32.totalorder %s119, %s120
      %p131 = scmp.eq.s32.totalorder %s22, 0
      %p132 = por %p130, %p131
      %p133 = scmp.ne.s32.totalorder %s119, %s120
      %p134 = scmp.eq.s32.totalorder %s23, 1
      %p135 = por %p133, %p134
      %p137 = scmp.ne.s32.totalorder %s120, %s136
      %p138 = scmp.eq.s32.totalorder %s23, 0
      %p139 = por %p137, %p138
      %p140 = scmp.le.s32.totalorder 1, %s17
      %p141 = scmp.lt.s32.totalorder %s17, 3
      %p142 = pnand %p140, %p141
      %p143 = pneg %p142
      // Predicated region
      $region9: #{tpu_custom_call.1} parent=5 // pred_check
        _
      $region10: #{tpu_custom_call.1} parent=5 // pred_check_branch
        %145 = sbr.rel (%p142) target = $region12
      $region11: #{tpu_custom_call.1} parent=5 // pred_region
        %s146 = ssub.s32 %s17, 1
        // Predicated region
        $region13: #{tpu_custom_call.1} parent=11 // pred_check
          %p147 = pneg %p64
        $region14: #{tpu_custom_call.1} parent=11 // pred_check_branch
          %149 = sbr.rel (%p147) target = $region16
        $region15: #{tpu_custom_call.1} parent=11 // pred_region
          %151 = vsyncadd [#allocation6], 0
          %s152 = sshll.u32 %s1, 4
          %s153 = int_to_ptr.hbm [resolvable:$true] %s152
          %s154 = sshll.u32 [#allocation5], 4
          %s155 = int_to_ptr.vmem [resolvable:$true] %s154
          %160 = dma.hbm_to_vmem [thread:$0]  %s153, 512, %s155, [#allocation6], 128, 128, 8
        $region16: #{tpu_custom_call.1} parent=11 // pred_fallthru
          _
        // Predicated region
        $region17: #{tpu_custom_call.1} parent=11 // pred_check
          %p161 = pneg %p85
        $region18: #{tpu_custom_call.1} parent=11 // pred_check_branch
          %163 = sbr.rel (%p161) target = $region20
        $region19: #{tpu_custom_call.1} parent=11 // pred_region
          _
        $region20: #{tpu_custom_call.1} parent=11 // pred_fallthru
          _
        // Predicated region
        $region21: #{tpu_custom_call.1} parent=11 // pred_check
          %p164 = pneg %p106
        $region22: #{tpu_custom_call.1} parent=11 // pred_check_branch
          %166 = sbr.rel (%p164) target = $region24
        $region23: #{tpu_custom_call.1} parent=11 // pred_region
          %168 = vsyncadd [#allocation6], 0
          %s169 = sshll.u32 %s3, 4
          %s170 = int_to_ptr.hbm [resolvable:$true] %s169
          %s171 = sshll.u32 [#allocation7], 4
          %s172 = int_to_ptr.vmem [resolvable:$true] %s171
          %177 = dma.hbm_to_vmem [thread:$0]  %s170, 1024, %s172, [#allocation6], 128, 128, 8
        $region24: #{tpu_custom_call.1} parent=11 // pred_fallthru
          _
      $region12: #{tpu_custom_call.1} parent=5 // pred_fallthru
        _
      %p178 = scmp.lt.s32.totalorder %s17, 2
      // Predicated region
      $region25: #{tpu_custom_call.1} parent=5 // pred_check
        %p179 = pneg %p178
      $region26: #{tpu_custom_call.1} parent=5 // pred_check_branch
        %181 = sbr.rel (%p179) target = $region28
      $region27: #{tpu_custom_call.1} parent=5 // pred_region
        // Predicated region
        $region29: #{tpu_custom_call.1} parent=27 // pred_check
          %p182 = pneg %p37
        $region30: #{tpu_custom_call.1} parent=27 // pred_check_branch
          %184 = sbr.rel (%p182) target = $region32
        $region31: #{tpu_custom_call.1} parent=27 // pred_region
          %s185 = sand.u32 %s27, 1
          %s186 = scalar_lea.sflag [#allocation3], %s185
          %s187 = sand.u32 %s27, 1
          %s188 = smul.addr %s187, 8
          %s189 = scalar_lea.vmem [#allocation2], %s188
          %191 = vsyncadd %s186, 0
          %s192 = smul.addr %s17, 8
          %s193 = scalar_lea.hbm %s0, %s192
          %s195 = sshll.u32 %s193, 4
          %s196 = int_to_ptr.hbm [resolvable:$true] %s195
          %s197 = sshll.u32 %s189, 4
          %s198 = int_to_ptr.vmem [resolvable:$true] %s197
          %200 = dma.hbm_to_vmem [thread:$0]  %s196, 128, %s198, %s186
        $region32: #{tpu_custom_call.1} parent=27 // pred_fallthru
          _
      $region28: #{tpu_custom_call.1} parent=5 // pred_fallthru
        _
      %p201 = scmp.le.s32.totalorder 1, %s17
      %p202 = scmp.lt.s32.totalorder %s17, 3
      %p203 = pnand %p201, %p202
      %p204 = pneg %p203
      // Predicated region
      $region33: #{tpu_custom_call.1} parent=5 // pred_check
        _
      $region34: #{tpu_custom_call.1} parent=5 // pred_check_branch
        %206 = sbr.rel (%p203) target = $region36
      $region35: #{tpu_custom_call.1} parent=5 // pred_region
        %s207 = ssub.s32 %s17, 1
        %s208 = sand.u32 %s30, 1
        %s209 = scalar_lea.sflag [#allocation3], %s208
        %s210 = sand.u32 %s30, 1
        %s211 = smul.addr %s210, 8
        %s212 = scalar_lea.vmem [#allocation2], %s211
        // Predicated region
        $region37: #{tpu_custom_call.1} parent=35 // pred_check
          %p213 = pneg %p43
        $region38: #{tpu_custom_call.1} parent=35 // pred_check_branch
          %215 = sbr.rel (%p213) target = $region40
        $region39: #{tpu_custom_call.1} parent=35 // pred_region
          %217 = dma.done %s209, 128
        $region40: #{tpu_custom_call.1} parent=35 // pred_fallthru
          _
        // Predicated region
        $region41: #{tpu_custom_call.1} parent=35 // pred_check
          %p218 = pneg %p64
        $region42: #{tpu_custom_call.1} parent=35 // pred_check_branch
          %220 = sbr.rel (%p218) target = $region44
        $region43: #{tpu_custom_call.1} parent=35 // pred_region
          %222 = dma.done [#allocation6], 512
        $region44: #{tpu_custom_call.1} parent=35 // pred_fallthru
          _
        // Predicated region
        $region45: #{tpu_custom_call.1} parent=35 // pred_check
          %p223 = pneg %p106
        $region46: #{tpu_custom_call.1} parent=35 // pred_check_branch
          %225 = sbr.rel (%p223) target = $region48
        $region47: #{tpu_custom_call.1} parent=35 // pred_region
          %227 = dma.done [#allocation6], 1024
        $region48: #{tpu_custom_call.1} parent=35 // pred_fallthru
          _
        %s228 = sand.u32 %s30, 1
        %s229 = scalar_lea.sflag [#allocation3], %s228
        %s230 = sand.u32 %s30, 1
        %s231 = smul.addr %s230, 8
        %s232 = scalar_lea.vmem [#allocation2], %s231
        %p233 = pneg %p43
        %p234 = pneg %p40
        %p235 = pneg %p64
        %p236 = pneg %p61
        %p237 = pneg %p85
        %p238 = pneg %p82
        %p239 = pneg %p106
        %p240 = pneg %p103
        %p241 = pneg %p132
        %p242 = pneg %p129
        %s243 = sand.u32 %s119, 1
        %s244 = scalar_lea.sflag [#allocation4], %s243
        %s245 = sand.u32 %s119, 1
        %s246 = smul.addr %s245, 8
        %s247 = scalar_lea.vmem [#allocation8], %s246
        %v248 = vld [vmem:[%s212] sm:$0xff]
        %v249 = vld [vmem:[#allocation5] sm:$0xff]
        %v250 = vld [vmem:[#allocation5 + $0x8] sm:$0xff]
        %v251 = vld [vmem:[#allocation5 + $0x10] sm:$0xff]
        %v252 = vld [vmem:[#allocation5 + $0x18] sm:$0xff]
        %vm253 = vcmask 261120
        %v255 = vsel %vm253, %v248, 0
        %257 = vmatpush.msra.mxu0 0.0
        %258 = vmatpush.msra.mxu0 0.0
        %259 = vmatpush.msra.mxu0 0.0
        %260 = vmatpush.msra.mxu0 0.0
        %261 = vmatpush.msra.mxu0 0.0
        %262 = vmatpush.msra.mxu0 0.0
        %263 = vmatpush.msra.mxu0 0.0
        %264 = vmatpush.msra.mxu0 0.0
        %265 = vmatpush.msra.mxu0 0.0
        %266 = vmatpush.msra.mxu0 0.0
        %267 = vmatpush.msra.mxu0 0.0
        %268 = vmatpush.msra.mxu0 0.0
        %269 = vmatpush.msra.mxu0 %v252
        %270 = vmatpush.msra.mxu0 %v251
        %271 = vmatpush.msra.mxu0 %v250
        %272 = vmatpush.msra.mxu0 %v249
        %273 = vmatmul.f32.gmra.mxu0 %v255
        %v274 = vpop.f32.mrf.mxu0
        %v275 = vadd.f32 0.0, %v274
        %276 = vdwg.mxu0
        %v277 = vld [vmem:[%s2] sm:$0x1]
        %v279 = vperm.slane %v277, 0
        %v281 = vsub.f32 %v275, %v279
        %v282 = vmul.f32 %v281, %v281
        %v283 = vld [vmem:[#allocation7] sm:$0xff]
        %v284 = vld [vmem:[#allocation7 + $0x8] sm:$0xff]
        %v285 = vld [vmem:[#allocation7 + $0x10] sm:$0xff]
        %v286 = vld [vmem:[#allocation7 + $0x18] sm:$0xff]
        %v287 = vld [vmem:[#allocation7 + $0x20] sm:$0xff]
        %v288 = vld [vmem:[#allocation7 + $0x28] sm:$0xff]
        %v289 = vld [vmem:[#allocation7 + $0x30] sm:$0xff]
        %v290 = vld [vmem:[#allocation7 + $0x38] sm:$0xff]
        %vm291 = vcmask 523264
        %v293 = vsel %vm291, %v282, 0
        %295 = vmatpush.msra.mxu0 0.0
        %296 = vmatpush.msra.mxu0 0.0
        %297 = vmatpush.msra.mxu0 0.0
        %298 = vmatpush.msra.mxu0 0.0
        %299 = vmatpush.msra.mxu0 0.0
        %300 = vmatpush.msra.mxu0 0.0
        %301 = vmatpush.msra.mxu0 0.0
        %302 = vmatpush.msra.mxu0 0.0
        %303 = vmatpush.msra.mxu0 %v290
        %304 = vmatpush.msra.mxu0 %v289
        %305 = vmatpush.msra.mxu0 %v288
        %306 = vmatpush.msra.mxu0 %v287
        %307 = vmatpush.msra.mxu0 %v286
        %308 = vmatpush.msra.mxu0 %v285
        %309 = vmatpush.msra.mxu0 %v284
        %310 = vmatpush.msra.mxu0 %v283
        %311 = vmatmul.f32.gmra.mxu0 %v293
        %v312 = vpop.f32.mrf.mxu0
        %v313 = vadd.f32 0.0, %v312
        %314 = vdwg.mxu0
        %v315 = vsub.f32 0.0, %v313
        %v316 = vmul.f32 %v315, 2.0
        %v317 = vmul.f32 %v316, 1.442695
        %v318 = vpow.pop %v317
        %v319 = vlaneseq
        %v320 = vand.u32 %v319, 127
        %vm321 = vcmp.lt.s32.totalorder %v320, 4
        %vm322 = vcmp.ge.s32.totalorder %v320, 4
        %vm323 = vcmp.lt.s32.totalorder %v320, 8
        %vm324 = vmand %vm322, %vm323
        %vm325 = vcmp.eq.s32.totalorder %v320, 8
        %v326 = vsel %vm321, %v318, 0.0
        %327 = vadd.xlane.f32.xlu0 %v326
        %v328 = vpop.xlane.xlu0 %327
        %v329 = vlog2.pop %v328
        %v330 = vmul.f32 %v329, 0.6931472
        %v331 = vsub.f32 %v316, %v330
        %v332 = vmax.f32 %v331, -3.4028235e+38
        %333 = vmax.xlane.f32.xlu0 %v326
        %v334 = vpop.xlane.xlu0 %333
        %v335 = vsub.f32 1.0, %v334
        %v336 = vsel %vm325, %v335, 0.0
        %v337 = vsel %vm324, %v332, %v336
        %v338 = vsel %vm321, %v318, %v337
        %339 = vst [vmem:[%s247] sm:$0xff] %v338
        %s340 = sand.u32 %s119, 1
        %s341 = scalar_lea.sflag [#allocation4], %s340
        %s342 = sand.u32 %s119, 1
        %s343 = smul.addr %s342, 8
        %s344 = scalar_lea.vmem [#allocation8], %s343
        // Predicated region
        $region49: #{tpu_custom_call.1} parent=35 // pred_check
          %p345 = pneg %p129
        $region50: #{tpu_custom_call.1} parent=35 // pred_check_branch
          %347 = sbr.rel (%p345) target = $region52
        $region51: #{tpu_custom_call.1} parent=35 // pred_region
          %349 = vsyncadd %s341, 0
          %s350 = smul.addr %s22, 8
          %s351 = scalar_lea.hbm %s4, %s350
          %s353 = sshll.u32 %s344, 4
          %s354 = int_to_ptr.vmem [resolvable:$true] %s353
          %s355 = sshll.u32 %s351, 4
          %s356 = int_to_ptr.hbm [resolvable:$true] %s355
          %358 = dma.vmem_to_hbm [thread:$0]  %s354, 128, %s356, %s341
        $region52: #{tpu_custom_call.1} parent=35 // pred_fallthru
          _
      $region36: #{tpu_custom_call.1} parent=5 // pred_fallthru
        _
      %p359 = scmp.le.s32.totalorder 2, %s17
      // Predicated region
      $region53: #{tpu_custom_call.1} parent=5 // pred_check
        %p360 = pneg %p359
      $region54: #{tpu_custom_call.1} parent=5 // pred_check_branch
        %362 = sbr.rel (%p360) target = $region56
      $region55: #{tpu_custom_call.1} parent=5 // pred_region
        %s363 = ssub.s32 %s17, 2
        // Predicated region
        $region57: #{tpu_custom_call.1} parent=55 // pred_check
          %p364 = pneg %p135
        $region58: #{tpu_custom_call.1} parent=55 // pred_check_branch
          %366 = sbr.rel (%p364) target = $region60
        $region59: #{tpu_custom_call.1} parent=55 // pred_region
          %s367 = sand.u32 %s120, 1
          %s368 = scalar_lea.sflag [#allocation4], %s367
          %s369 = sand.u32 %s120, 1
          %s370 = smul.addr %s369, 8
          %s371 = scalar_lea.vmem [#allocation8], %s370
          %373 = dma.done %s368, 128
        $region60: #{tpu_custom_call.1} parent=55 // pred_fallthru
          _
      $region56: #{tpu_custom_call.1} parent=5 // pred_fallthru
        _
    $region6: #{tpu_custom_call.1} parent=1 // loop_footer
      %s21 = sadd.s32 1, %s17
    $region7: #{tpu_custom_call.1} parent=1 // loop_footer_branch
      %16 = sbr.rel target = $region3
    $region8: #{tpu_custom_call.1} parent=1 // loop_exit
      _
    %374 = vsyncpa [#allocation3], 1
    %s375 = scalar_lea.sflag [#allocation3], 1
    %376 = vsyncpa %s375, 1
    %377 = vsyncpa [#allocation6], 1
    %378 = vsyncpa [#allocation4], 1
    %s379 = scalar_lea.sflag [#allocation4], 1
    %380 = vsyncpa %s379, 1

</llo_original>
